<compile_context>
chip_gen: v6e
topology: v6e:2x2x1
jax: 0.10.0
libtpu: 0.0.40
codegen_flags: <defaults>
</compile_context>

<pallas_src>
import jax
import jax.numpy as jnp
import numpy as np
from jax.experimental import pallas as pl
from jax.experimental.pallas import tpu as pltpu

HIDDEN = 32     # hidden_dim (small, per instructions)
VOCAB = 16      # input_size
SEQ = 8         # memory length (interface only; branch is dead w.r.t. outputs)
GATE = 128      # lane-aligned width of each packed gate group


# ---------------------------------------------------------------------------
# Pallas kernel: embedding lookup + one GRU cell step, fully fused.
# ---------------------------------------------------------------------------
def encoder_step_kernel(tok_ref, emb_ref, h_ref, wx_ref, wh_ref, b_ref, h_out_ref):
    tok = tok_ref[0]                       # scalar token id from SMEM
    x = emb_ref[tok]                       # (1, H) embedding row; PE(0) folded into bias
    h = h_ref[...]                         # (1, H) previous hidden state

    # Packed gate pre-activations: (1, 4*GATE)
    g = (jnp.dot(x, wx_ref[...], preferred_element_type=jnp.float32)
         + jnp.dot(h, wh_ref[...], preferred_element_type=jnp.float32)
         + b_ref[...])

    r = jax.nn.sigmoid(g[:, 0 * GATE:1 * GATE])              # gi_r + gh_r (+biases)
    z = jax.nn.sigmoid(g[:, 1 * GATE:2 * GATE])              # gi_z + gh_z (+biases)
    n = jnp.tanh(g[:, 2 * GATE:3 * GATE] + r * g[:, 3 * GATE:4 * GATE])

    # Only the first HIDDEN lanes of each gate group are meaningful.
    h_out_ref[...] = (1.0 - z[:, :HIDDEN]) * n[:, :HIDDEN] + z[:, :HIDDEN] * h


def encoder_step(tok, emb, h0, w_x, w_h, b_pack):
    vmem = pl.BlockSpec(memory_space=pltpu.MemorySpace.VMEM)
    smem = pl.BlockSpec(memory_space=pltpu.MemorySpace.SMEM)
    return pl.pallas_call(
        encoder_step_kernel,
        out_shape=jax.ShapeDtypeStruct((1, HIDDEN), jnp.float32),
        in_specs=[smem, vmem, vmem, vmem, vmem, vmem],
        out_specs=vmem,
    )(tok, emb, h0, w_x, w_h, b_pack)


# ---------------------------------------------------------------------------
# Parameter init (torch layout) and one-time packing for the kernel.
# ---------------------------------------------------------------------------
def init_params(key, vocab, hidden):
    k_emb, k_wih, k_whh, k_bih, k_bhh = jax.random.split(key, 5)
    bound = 1.0 / np.sqrt(hidden)
    return {
        "embedding": jax.random.normal(k_emb, (vocab, hidden), jnp.float32),
        "w_ih": jax.random.uniform(k_wih, (3 * hidden, hidden), jnp.float32, -bound, bound),
        "w_hh": jax.random.uniform(k_whh, (3 * hidden, hidden), jnp.float32, -bound, bound),
        "b_ih": jax.random.uniform(k_bih, (3 * hidden,), jnp.float32, -bound, bound),
        "b_hh": jax.random.uniform(k_bhh, (3 * hidden,), jnp.float32, -bound, bound),
    }


def pack_params(raw):
    """One-time host-side packing into lane-aligned gate groups."""
    H = HIDDEN
    w_ih = np.asarray(raw["w_ih"], np.float32)   # (3H, H), gate order [r, z, n]
    w_hh = np.asarray(raw["w_hh"], np.float32)
    b_ih = np.asarray(raw["b_ih"], np.float32)
    b_hh = np.asarray(raw["b_hh"], np.float32)

    w_x = np.zeros((H, 4 * GATE), np.float32)     # x-path weights (gi_*)
    w_h = np.zeros((H, 4 * GATE), np.float32)     # h-path weights (gh_*)
    b_pack = np.zeros((1, 4 * GATE), np.float32)

    for gate in range(3):
        wi = w_ih[gate * H:(gate + 1) * H].T      # (H, H) == W_i*_gate^T
        wh = w_hh[gate * H:(gate + 1) * H].T
        bi = b_ih[gate * H:(gate + 1) * H]
        bh = b_hh[gate * H:(gate + 1) * H]
        if gate < 2:
            # r, z: only gi+gh is ever used -> both land in the same group;
            # biases are summed.
            w_x[:, gate * GATE:gate * GATE + H] = wi
            w_h[:, gate * GATE:gate * GATE + H] = wh
            b_pack[0, gate * GATE:gate * GATE + H] = bi + bh
        else:
            # n: gi_n and gh_n must stay separate (n = tanh(gi_n + r*gh_n)).
            w_x[:, 2 * GATE:2 * GATE + H] = wi
            w_h[:, 3 * GATE:3 * GATE + H] = wh
            b_pack[0, 2 * GATE:2 * GATE + H] = bi
            b_pack[0, 3 * GATE:3 * GATE + H] = bh

    # Fold PositionalEncoding at position 0 (sin(0)=0 on even dims, cos(0)=1 on
    # odd dims) into the x-path bias: (x+pe0)@Wx == x@Wx + pe0@Wx.
    pe0 = np.zeros((H,), np.float32)
    pe0[1::2] = 1.0
    b_pack[0] += pe0 @ w_x

    # Embedding table reshaped so the token lookup is a dynamic LEADING-axis
    # index inside the kernel (well-supported path).
    emb = np.asarray(raw["embedding"], np.float32).reshape(VOCAB, 1, H)

    return {
        "embedding": jnp.asarray(emb),
        "w_x": jnp.asarray(w_x),
        "w_h": jnp.asarray(w_h),
        "b_pack": jnp.asarray(b_pack),
    }


# ---------------------------------------------------------------------------
# Forward pass (Encoder.forward equivalent).
# ---------------------------------------------------------------------------
@jax.jit
def encoder_forward(x_token, hidden, memory_tokens, kparams):
    del memory_tokens  # memory branch is dead w.r.t. outputs (empty attention stack)

    tok = jnp.asarray(x_token, jnp.int32).reshape(1)
    h0 = hidden.reshape(1, HIDDEN).astype(jnp.float32)

    h_new = encoder_step(tok, kparams["embedding"], h0,
                         kparams["w_x"], kparams["w_h"], kparams["b_pack"])

    x_out = h_new.reshape(1, 1, HIDDEN)       # GRU output, seq_len = 1
    hidden_out = h_new.reshape(1, 1, HIDDEN)  # new hidden state (num_layers = 1)
    return x_out, hidden_out


# ---------------------------------------------------------------------------
# Pure-numpy reference (torch.nn.GRU semantics) for a correctness check.
# ---------------------------------------------------------------------------
def gru_reference(x_token, hidden, raw):
    H = HIDDEN
    emb = np.asarray(raw["embedding"], np.float32)
    w_ih = np.asarray(raw["w_ih"], np.float32)
    w_hh = np.asarray(raw["w_hh"], np.float32)
    b_ih = np.asarray(raw["b_ih"], np.float32)
    b_hh = np.asarray(raw["b_hh"], np.float32)

    pe0 = np.zeros((H,), np.float32)
    pe0[1::2] = 1.0
    x = emb[int(x_token)] + pe0
    h = np.asarray(hidden, np.float32).reshape(H)

    gi = x @ w_ih.T + b_ih
    gh = h @ w_hh.T + b_hh
    r = 1.0 / (1.0 + np.exp(-(gi[:H] + gh[:H])))
    z = 1.0 / (1.0 + np.exp(-(gi[H:2 * H] + gh[H:2 * H])))
    n = np.tanh(gi[2 * H:] + r * gh[2 * H:])
    return (1.0 - z) * n + z * h


if __name__ == "__main__":
    key = jax.random.PRNGKey(0)
    k_params, k_x, k_mem, k_h = jax.random.split(key, 4)

    raw_params = init_params(k_params, VOCAB, HIDDEN)
    kparams = pack_params(raw_params)

    x_token = jax.random.randint(k_x, (), 0, VOCAB, dtype=jnp.int32)          # scalar token
    memory_tokens = jax.random.randint(k_mem, (SEQ, 1), 0, VOCAB, jnp.int32)  # (L, 1) tokens
    hidden = jax.random.normal(k_h, (1, 1, HIDDEN), jnp.float32)              # (num_layers, 1, H)

    x_out, hidden_out = encoder_forward(x_token, hidden, memory_tokens, kparams)
    jax.block_until_ready((x_out, hidden_out))

    assert x_out.shape == (1, 1, HIDDEN) and hidden_out.shape == (1, 1, HIDDEN)
    assert bool(jnp.all(jnp.isfinite(x_out)))

    ref = gru_reference(x_token, hidden, raw_params)
    assert np.allclose(np.asarray(x_out).reshape(-1), ref, atol=1e-4, rtol=1e-4)
    assert np.allclose(np.asarray(hidden_out).reshape(-1), ref, atol=1e-4, rtol=1e-4)
    print("KERNEL_OK")
</pallas_src>

<mosaic_0001>
module attributes {stable_mosaic.version = 11 : i64} {
  func.func @encoder_step_kernel(%arg0: memref<1xi32, #tpu.memory_space<smem>>, %arg1: memref<16x1x32xf32, #tpu.memory_space<vmem>>, %arg2: memref<1x32xf32, #tpu.memory_space<vmem>>, %arg3: memref<32x512xf32, #tpu.memory_space<vmem>>, %arg4: memref<32x512xf32, #tpu.memory_space<vmem>>, %arg5: memref<1x512xf32, #tpu.memory_space<vmem>>, %arg6: memref<1x32xf32, #tpu.memory_space<vmem>>) attributes {dimension_semantics = [], scalar_prefetch = 0 : i64, scratch_operands = 0 : i64, tpu.core_type = #tpu.core_type<tc>} {
    %c0 = arith.constant 0 : index
    %0 = memref.load %arg0[%c0] : memref<1xi32, #tpu.memory_space<smem>>
    %1 = arith.index_cast %0 : i32 to index
    %c0_0 = arith.constant 0 : index
    %c0_1 = arith.constant 0 : index
    %2 = vector.load %arg1[%1, %c0_0, %c0_1] : memref<16x1x32xf32, #tpu.memory_space<vmem>>, vector<1x1x32xf32>
    %3 = vector.shape_cast %2 : vector<1x1x32xf32> to vector<1x32xf32>
    %c0_2 = arith.constant 0 : index
    %c0_3 = arith.constant 0 : index
    %4 = vector.load %arg2[%c0_2, %c0_3] : memref<1x32xf32, #tpu.memory_space<vmem>>, vector<1x32xf32>
    %c0_4 = arith.constant 0 : index
    %c0_5 = arith.constant 0 : index
    %5 = vector.load %arg3[%c0_4, %c0_5] : memref<32x512xf32, #tpu.memory_space<vmem>>, vector<32x512xf32>
    %cst = arith.constant dense<0.000000e+00> : vector<1x512xf32>
    %6 = tpu.matmul %3, %5, %cst {dimension_numbers = #tpu.dot_dimension_numbers<[1], [0], [0], [1], [0, 0, 1, 1], [], []>} : vector<1x32xf32>, vector<32x512xf32>, vector<1x512xf32> -> vector<1x512xf32>
    %c0_6 = arith.constant 0 : index
    %c0_7 = arith.constant 0 : index
    %7 = vector.load %arg4[%c0_6, %c0_7] : memref<32x512xf32, #tpu.memory_space<vmem>>, vector<32x512xf32>
    %cst_8 = arith.constant dense<0.000000e+00> : vector<1x512xf32>
    %8 = tpu.matmul %4, %7, %cst_8 {dimension_numbers = #tpu.dot_dimension_numbers<[1], [0], [0], [1], [0, 0, 1, 1], [], []>} : vector<1x32xf32>, vector<32x512xf32>, vector<1x512xf32> -> vector<1x512xf32>
    %9 = arith.addf %6, %8 : vector<1x512xf32>
    %c0_9 = arith.constant 0 : index
    %c0_10 = arith.constant 0 : index
    %10 = vector.load %arg5[%c0_9, %c0_10] : memref<1x512xf32, #tpu.memory_space<vmem>>, vector<1x512xf32>
    %11 = arith.addf %9, %10 : vector<1x512xf32>
    %12 = vector.extract_strided_slice %11 {offsets = [0, 0], sizes = [1, 128], strides = [1, 1]} : vector<1x512xf32> to vector<1x128xf32>
    %13 = arith.negf %12 : vector<1x128xf32>
    %14 = math.exp %13 : vector<1x128xf32>
    %cst_11 = arith.constant 1.000000e+00 : f32
    %15 = vector.broadcast %cst_11 : f32 to vector<1x128xf32>
    %16 = arith.addf %15, %14 : vector<1x128xf32>
    %17 = arith.divf %15, %16 : vector<1x128xf32>
    %18 = vector.extract_strided_slice %11 {offsets = [0, 128], sizes = [1, 128], strides = [1, 1]} : vector<1x512xf32> to vector<1x128xf32>
    %19 = arith.negf %18 : vector<1x128xf32>
    %20 = math.exp %19 : vector<1x128xf32>
    %cst_12 = arith.constant 1.000000e+00 : f32
    %21 = vector.broadcast %cst_12 : f32 to vector<1x128xf32>
    %22 = arith.addf %21, %20 : vector<1x128xf32>
    %23 = arith.divf %21, %22 : vector<1x128xf32>
    %24 = vector.extract_strided_slice %11 {offsets = [0, 256], sizes = [1, 128], strides = [1, 1]} : vector<1x512xf32> to vector<1x128xf32>
    %25 = vector.extract_strided_slice %11 {offsets = [0, 384], sizes = [1, 128], strides = [1, 1]} : vector<1x512xf32> to vector<1x128xf32>
    %26 = arith.mulf %17, %25 : vector<1x128xf32>
    %27 = arith.addf %24, %26 : vector<1x128xf32>
    %28 = math.tanh %27 : vector<1x128xf32>
    %29 = vector.extract_strided_slice %23 {offsets = [0, 0], sizes = [1, 32], strides = [1, 1]} : vector<1x128xf32> to vector<1x32xf32>
    %cst_13 = arith.constant 1.000000e+00 : f32
    %30 = vector.broadcast %cst_13 : f32 to vector<1x32xf32>
    %31 = arith.subf %30, %29 : vector<1x32xf32>
    %32 = vector.extract_strided_slice %28 {offsets = [0, 0], sizes = [1, 32], strides = [1, 1]} : vector<1x128xf32> to vector<1x32xf32>
    %33 = arith.mulf %31, %32 : vector<1x32xf32>
    %34 = vector.extract_strided_slice %23 {offsets = [0, 0], sizes = [1, 32], strides = [1, 1]} : vector<1x128xf32> to vector<1x32xf32>
    %35 = arith.mulf %34, %4 : vector<1x32xf32>
    %36 = arith.addf %33, %35 : vector<1x32xf32>
    %c0_14 = arith.constant 0 : index
    %c0_15 = arith.constant 0 : index
    %37 = vector.load %arg6[%c0_14, %c0_15] : memref<1x32xf32, #tpu.memory_space<vmem>>, vector<1x32xf32>
    tpu.vector_store %arg6[%c0_14, %c0_15], %36 {strides = array<i32>} : memref<1x32xf32, #tpu.memory_space<vmem>>, vector<1x32xf32>,
    return
  }
}

</mosaic_0001>

<llo_original>
// kernel: encoder_forward.1
$region0: #{encoder_forward.1}
  #allocation0 [shape = 'u32[]', space=smem, size = 0x4, offset = 0x4, fixed_abs, tag = 'smem constant byte address 0x4 - core index']
  #allocation1 [shape = 'u32[144,128]{1,0:T(1,128)}', space=vmem, size = 0x12000, scoped, tag = 'internal scratch']
  #allocation2 [shape = 's32[1]{0:T(128)S(6)}', space=smem, size = 0x200, scoped, tag = 'scoped memory for encoder_forward.1']
  %s0 = inlined_call_operand.<no memory space> [shape: s32[1], index: 0, kind: input, shape index: {}]
  %s1 = inlined_call_operand.hbm [shape: f32[16,1,32], index: 1, kind: input, shape index: {}]
  %s2 = inlined_call_operand.vmem [shape: f32[1,32], index: 2, kind: input, shape index: {}]
  %s3 = inlined_call_operand.hbm [shape: f32[32,512], index: 3, kind: input, shape index: {}]
  %s4 = inlined_call_operand.hbm [shape: f32[32,512], index: 4, kind: input, shape index: {}]
  %s5 = inlined_call_operand.vmem [shape: f32[1,512], index: 5, kind: input, shape index: {}]
  %s6 = inlined_call_operand.vmem [shape: f32[1,32], index: 6, kind: output, shape index: {}]
  %s7 = sld [smem:[#allocation0]]
  $region46: #{encoder_forward.1} parent=0
    _
  %s9 = ssub.s32 1, %s7
  %s10 = scalar_select 0, %s9, %s7
  %11 = sst [smem:[#allocation2]] %s0
  $region1: #{encoder_forward.1} parent=0
    #allocation3 [shape = 'u8[8192]{0}', space=vmem, size = 0x2000, scoped, tag = 'input window, operand 1, single buffered']
    #allocation4 [shape = 's32[1]{0}', space=sflag, size = 0x4, scoped, tag = 'scoped memory for encoder_forward.1']
    #allocation5 [shape = 'u8[65536]{0}', space=vmem, size = 0x10000, scoped, tag = 'input window, operand 3, single buffered']
    #allocation6 [shape = 's32[1]{0}', space=sflag, size = 0x4, scoped, tag = 'scoped memory for encoder_forward.1']
    #allocation7 [shape = 'u8[65536]{0}', space=vmem, size = 0x10000, scoped, tag = 'input window, operand 4, single buffered']
    %12 = vsyncpa [#allocation4], 0
    %13 = vsyncpa [#allocation6], 0
    // Predicated region
    $region2: #{encoder_forward.1} parent=1 // pred_check
      _
    $region3: #{encoder_forward.1} parent=1 // pred_check_branch
      %15 = sbr.rel (0) target = $region5
    $region4: #{encoder_forward.1} parent=1 // pred_region
      _
    $region5: #{encoder_forward.1} parent=1 // pred_fallthru
      _
    // Predicated region
    $region6: #{encoder_forward.1} parent=1 // pred_check
      _
    $region7: #{encoder_forward.1} parent=1 // pred_check_branch
      %17 = sbr.rel (0) target = $region9
    $region8: #{encoder_forward.1} parent=1 // pred_region
      %s19 = ssub.s32 256, 256
      %20 = vsyncadd [#allocation4], %s19
      %s21 = sshll.u32 [#allocation3], 4
      %s22 = int_to_ptr.vmem [resolvable:$true] %s21
      %27 = dma.hbm_to_vmem [thread:$0]  %s1, 256, %s22, [#allocation4], 16, 16, 1
    $region9: #{encoder_forward.1} parent=1 // pred_fallthru
      _
    // Predicated region
    $region10: #{encoder_forward.1} parent=1 // pred_check
      _
    $region11: #{encoder_forward.1} parent=1 // pred_check_branch
      %29 = sbr.rel (0) target = $region13
    $region12: #{encoder_forward.1} parent=1 // pred_region
      _
    $region13: #{encoder_forward.1} parent=1 // pred_fallthru
      _
    // Predicated region
    $region14: #{encoder_forward.1} parent=1 // pred_check
      _
    $region15: #{encoder_forward.1} parent=1 // pred_check_branch
      %31 = sbr.rel (0) target = $region17
    $region16: #{encoder_forward.1} parent=1 // pred_region
      %s33 = ssub.s32 2048, 2048
      %34 = vsyncadd [#allocation6], %s33
      %s35 = sshll.u32 [#allocation5], 4
      %s36 = int_to_ptr.vmem [resolvable:$true] %s35
      %41 = dma.hbm_to_vmem [thread:$0]  %s3, 2048, %s36, [#allocation6], 512, 512, 32
    $region17: #{encoder_forward.1} parent=1 // pred_fallthru
      _
    // Predicated region
    $region18: #{encoder_forward.1} parent=1 // pred_check
      _
    $region19: #{encoder_forward.1} parent=1 // pred_check_branch
      %43 = sbr.rel (0) target = $region21
    $region20: #{encoder_forward.1} parent=1 // pred_region
      %s45 = ssub.s32 2048, 2048
      %46 = vsyncadd [#allocation6], %s45
      %s47 = sshll.u32 [#allocation7], 4
      %s48 = int_to_ptr.vmem [resolvable:$true] %s47
      %53 = dma.hbm_to_vmem [thread:$0]  %s4, 2048, %s48, [#allocation6], 512, 512, 32
    $region21: #{encoder_forward.1} parent=1 // pred_fallthru
      _
    // Predicated region
    $region22: #{encoder_forward.1} parent=1 // pred_check
      _
    $region23: #{encoder_forward.1} parent=1 // pred_check_branch
      %55 = sbr.rel (0) target = $region25
    $region24: #{encoder_forward.1} parent=1 // pred_region
      _
    $region25: #{encoder_forward.1} parent=1 // pred_fallthru
      _
    // Predicated region
    $region26: #{encoder_forward.1} parent=1 // pred_check
      _
    $region27: #{encoder_forward.1} parent=1 // pred_check_branch
      %57 = sbr.rel (0) target = $region29
    $region28: #{encoder_forward.1} parent=1 // pred_region
      %58 = dma.done [#allocation4], 256
    $region29: #{encoder_forward.1} parent=1 // pred_fallthru
      _
    // Predicated region
    $region30: #{encoder_forward.1} parent=1 // pred_check
      _
    $region31: #{encoder_forward.1} parent=1 // pred_check_branch
      %60 = sbr.rel (0) target = $region33
    $region32: #{encoder_forward.1} parent=1 // pred_region
      %61 = dma.done [#allocation6], 2048
    $region33: #{encoder_forward.1} parent=1 // pred_fallthru
      _
    // Predicated region
    $region34: #{encoder_forward.1} parent=1 // pred_check
      _
    $region35: #{encoder_forward.1} parent=1 // pred_check_branch
      %63 = sbr.rel (0) target = $region37
    $region36: #{encoder_forward.1} parent=1 // pred_region
      %64 = dma.done [#allocation6], 2048
    $region37: #{encoder_forward.1} parent=1 // pred_fallthru
      _
    %s65 = sld [smem:[#allocation2]]
    %s66 = scalar_lea.vmem [#allocation3], %s65
    %v67 = vld [vmem:[%s66] sm:$0x1]
    %v68 = vld [vmem:[%s2] sm:$0x1]
    %v69 = vld [vmem:[#allocation5] sm:$0xff]
    %v70 = vld [vmem:[#allocation5 + $0x8] sm:$0xff]
    %v71 = vld [vmem:[#allocation5 + $0x10] sm:$0xff]
    %v72 = vld [vmem:[#allocation5 + $0x18] sm:$0xff]
    %v73 = vld [vmem:[#allocation5 + $0x20] sm:$0xff]
    %v74 = vld [vmem:[#allocation5 + $0x28] sm:$0xff]
    %v75 = vld [vmem:[#allocation5 + $0x30] sm:$0xff]
    %v76 = vld [vmem:[#allocation5 + $0x38] sm:$0xff]
    %v77 = vld [vmem:[#allocation5 + $0x40] sm:$0xff]
    %v78 = vld [vmem:[#allocation5 + $0x48] sm:$0xff]
    %v79 = vld [vmem:[#allocation5 + $0x50] sm:$0xff]
    %v80 = vld [vmem:[#allocation5 + $0x58] sm:$0xff]
    %v81 = vld [vmem:[#allocation5 + $0x60] sm:$0xff]
    %v82 = vld [vmem:[#allocation5 + $0x68] sm:$0xff]
    %v83 = vld [vmem:[#allocation5 + $0x70] sm:$0xff]
    %v84 = vld [vmem:[#allocation5 + $0x78] sm:$0xff]
    %v85 = vld [vmem:[#allocation7] sm:$0xff]
    %v86 = vld [vmem:[#allocation7 + $0x8] sm:$0xff]
    %v87 = vld [vmem:[#allocation7 + $0x10] sm:$0xff]
    %v88 = vld [vmem:[#allocation7 + $0x18] sm:$0xff]
    %v89 = vld [vmem:[#allocation7 + $0x20] sm:$0xff]
    %v90 = vld [vmem:[#allocation7 + $0x28] sm:$0xff]
    %v91 = vld [vmem:[#allocation7 + $0x30] sm:$0xff]
    %v92 = vld [vmem:[#allocation7 + $0x38] sm:$0xff]
    %v93 = vld [vmem:[#allocation7 + $0x40] sm:$0xff]
    %v94 = vld [vmem:[#allocation7 + $0x48] sm:$0xff]
    %v95 = vld [vmem:[#allocation7 + $0x50] sm:$0xff]
    %v96 = vld [vmem:[#allocation7 + $0x58] sm:$0xff]
    %v97 = vld [vmem:[#allocation7 + $0x60] sm:$0xff]
    %v98 = vld [vmem:[#allocation7 + $0x68] sm:$0xff]
    %v99 = vld [vmem:[#allocation7 + $0x70] sm:$0xff]
    %v100 = vld [vmem:[#allocation7 + $0x78] sm:$0xff]
    %vm101 = vcmask 261120
    %v103 = vsel %vm101, %v68, 0
    %105 = vmatprep.subr.mxu0 0.0
    %106 = vmatpush1.msra.mxu0 0.0
    %107 = vmatprep.subr.mxu0 0.0
    %108 = vmatpush1.msra.mxu0 0.0
    %109 = vmatprep.subr.mxu0 0.0
    %110 = vmatpush1.msra.mxu0 0.0
    %111 = vmatprep.subr.mxu0 0.0
    %112 = vmatpush1.msra.mxu0 0.0
    %113 = vmatprep.subr.mxu0 0.0
    %114 = vmatpush1.msra.mxu0 0.0
    %115 = vmatprep.subr.mxu0 0.0
    %116 = vmatpush1.msra.mxu0 0.0
    %117 = vmatprep.subr.mxu0 0.0
    %118 = vmatpush1.msra.mxu0 0.0
    %119 = vmatprep.subr.mxu0 0.0
    %120 = vmatpush1.msra.mxu0 0.0
    %121 = vmatprep.subr.mxu0 0.0
    %122 = vmatpush1.msra.mxu0 0.0
    %123 = vmatprep.subr.mxu0 0.0
    %124 = vmatpush1.msra.mxu0 0.0
    %125 = vmatprep.subr.mxu0 0.0
    %126 = vmatpush1.msra.mxu0 0.0
    %127 = vmatprep.subr.mxu0 0.0
    %128 = vmatpush1.msra.mxu0 0.0
    %129 = vmatprep.subr.mxu0 %v98
    %130 = vmatpush1.msra.mxu0 %v97
    %131 = vmatprep.subr.mxu0 %v94
    %132 = vmatpush1.msra.mxu0 %v93
    %133 = vmatprep.subr.mxu0 %v90
    %134 = vmatpush1.msra.mxu0 %v89
    %135 = vmatprep.subr.mxu0 %v86
    %136 = vmatpush1.msra.mxu0 %v85
    %137 = vmatprep.subr.mxu0 0.0
    %138 = vmatpush2.msra.mxu0 0.0
    %139 = vmatprep.subr.mxu0 0.0
    %140 = vmatpush2.msra.mxu0 0.0
    %141 = vmatprep.subr.mxu0 0.0
    %142 = vmatpush2.msra.mxu0 0.0
    %143 = vmatprep.subr.mxu0 0.0
    %144 = vmatpush2.msra.mxu0 0.0
    %145 = vmatprep.subr.mxu0 0.0
    %146 = vmatpush2.msra.mxu0 0.0
    %147 = vmatprep.subr.mxu0 0.0
    %148 = vmatpush2.msra.mxu0 0.0
    %149 = vmatprep.subr.mxu0 0.0
    %150 = vmatpush2.msra.mxu0 0.0
    %151 = vmatprep.subr.mxu0 0.0
    %152 = vmatpush2.msra.mxu0 0.0
    %153 = vmatprep.subr.mxu0 0.0
    %154 = vmatpush2.msra.mxu0 0.0
    %155 = vmatprep.subr.mxu0 0.0
    %156 = vmatpush2.msra.mxu0 0.0
    %157 = vmatprep.subr.mxu0 0.0
    %158 = vmatpush2.msra.mxu0 0.0
    %159 = vmatprep.subr.mxu0 0.0
    %160 = vmatpush2.msra.mxu0 0.0
    %161 = vmatprep.subr.mxu0 0.0
    %162 = vmatpush2.msra.mxu0 0.0
    %163 = vmatprep.subr.mxu0 0.0
    %164 = vmatpush2.msra.mxu0 0.0
    %165 = vmatprep.subr.mxu0 0.0
    %166 = vmatpush2.msra.mxu0 0.0
    %167 = vmatprep.subr.mxu0 0.0
    %168 = vmatpush2.msra.mxu0 0.0
    %169 = vmatprep.mubr.f32.mxu0 0.0
    %170 = vmatmul.mubr.f32.gmra.mxu0 %v103
    %v171 = vpop.f32.mrf.mxu0
    %v172 = vadd.f32 0.0, %v171
    %v173 = vpop.f32.mrf.mxu0
    %v174 = vadd.f32 0.0, %v173
    %175 = vdwg.mxu0
    %176 = vmatprep.subr.mxu0 0.0
    %177 = vmatpush1.msra.mxu0 0.0
    %178 = vmatprep.subr.mxu0 0.0
    %179 = vmatpush1.msra.mxu0 0.0
    %180 = vmatprep.subr.mxu0 0.0
    %181 = vmatpush1.msra.mxu0 0.0
    %182 = vmatprep.subr.mxu0 0.0
    %183 = vmatpush1.msra.mxu0 0.0
    %184 = vmatprep.subr.mxu0 0.0
    %185 = vmatpush1.msra.mxu0 0.0
    %186 = vmatprep.subr.mxu0 0.0
    %187 = vmatpush1.msra.mxu0 0.0
    %188 = vmatprep.subr.mxu0 0.0
    %189 = vmatpush1.msra.mxu0 0.0
    %190 = vmatprep.subr.mxu0 0.0
    %191 = vmatpush1.msra.mxu0 0.0
    %192 = vmatprep.subr.mxu0 0.0
    %193 = vmatpush1.msra.mxu0 0.0
    %194 = vmatprep.subr.mxu0 0.0
    %195 = vmatpush1.msra.mxu0 0.0
    %196 = vmatprep.subr.mxu0 0.0
    %197 = vmatpush1.msra.mxu0 0.0
    %198 = vmatprep.subr.mxu0 0.0
    %199 = vmatpush1.msra.mxu0 0.0
    %200 = vmatprep.subr.mxu0 %v100
    %201 = vmatpush1.msra.mxu0 %v99
    %202 = vmatprep.subr.mxu0 %v96
    %203 = vmatpush1.msra.mxu0 %v95
    %204 = vmatprep.subr.mxu0 %v92
    %205 = vmatpush1.msra.mxu0 %v91
    %206 = vmatprep.subr.mxu0 %v88
    %207 = vmatpush1.msra.mxu0 %v87
    %208 = vmatprep.subr.mxu0 0.0
    %209 = vmatpush2.msra.mxu0 0.0
    %210 = vmatprep.subr.mxu0 0.0
    %211 = vmatpush2.msra.mxu0 0.0
    %212 = vmatprep.subr.mxu0 0.0
    %213 = vmatpush2.msra.mxu0 0.0
    %214 = vmatprep.subr.mxu0 0.0
    %215 = vmatpush2.msra.mxu0 0.0
    %216 = vmatprep.subr.mxu0 0.0
    %217 = vmatpush2.msra.mxu0 0.0
    %218 = vmatprep.subr.mxu0 0.0
    %219 = vmatpush2.msra.mxu0 0.0
    %220 = vmatprep.subr.mxu0 0.0
    %221 = vmatpush2.msra.mxu0 0.0
    %222 = vmatprep.subr.mxu0 0.0
    %223 = vmatpush2.msra.mxu0 0.0
    %224 = vmatprep.subr.mxu0 0.0
    %225 = vmatpush2.msra.mxu0 0.0
    %226 = vmatprep.subr.mxu0 0.0
    %227 = vmatpush2.msra.mxu0 0.0
    %228 = vmatprep.subr.mxu0 0.0
    %229 = vmatpush2.msra.mxu0 0.0
    %230 = vmatprep.subr.mxu0 0.0
    %231 = vmatpush2.msra.mxu0 0.0
    %232 = vmatprep.subr.mxu0 0.0
    %233 = vmatpush2.msra.mxu0 0.0
    %234 = vmatprep.subr.mxu0 0.0
    %235 = vmatpush2.msra.mxu0 0.0
    %236 = vmatprep.subr.mxu0 0.0
    %237 = vmatpush2.msra.mxu0 0.0
    %238 = vmatprep.subr.mxu0 0.0
    %239 = vmatpush2.msra.mxu0 0.0
    %240 = vmatprep.mubr.f32.mxu0 0.0
    %241 = vmatmul.mubr.f32.gmra.mxu0 %v103
    %v242 = vpop.f32.mrf.mxu0
    %v243 = vadd.f32 0.0, %v242
    %v244 = vpop.f32.mrf.mxu0
    %v245 = vadd.f32 0.0, %v244
    %246 = vdwg.mxu0
    %v248 = vsel %vm101, %v67, 0
    %250 = vmatprep.subr.mxu0 0.0
    %251 = vmatpush1.msra.mxu0 0.0
    %252 = vmatprep.subr.mxu0 0.0
    %253 = vmatpush1.msra.mxu0 0.0
    %254 = vmatprep.subr.mxu0 0.0
    %255 = vmatpush1.msra.mxu0 0.0
    %256 = vmatprep.subr.mxu0 0.0
    %257 = vmatpush1.msra.mxu0 0.0
    %258 = vmatprep.subr.mxu0 0.0
    %259 = vmatpush1.msra.mxu0 0.0
    %260 = vmatprep.subr.mxu0 0.0
    %261 = vmatpush1.msra.mxu0 0.0
    %262 = vmatprep.subr.mxu0 0.0
    %263 = vmatpush1.msra.mxu0 0.0
    %264 = vmatprep.subr.mxu0 0.0
    %265 = vmatpush1.msra.mxu0 0.0
    %266 = vmatprep.subr.mxu0 0.0
    %267 = vmatpush1.msra.mxu0 0.0
    %268 = vmatprep.subr.mxu0 0.0
    %269 = vmatpush1.msra.mxu0 0.0
    %270 = vmatprep.subr.mxu0 0.0
    %271 = vmatpush1.msra.mxu0 0.0
    %272 = vmatprep.subr.mxu0 0.0
    %273 = vmatpush1.msra.mxu0 0.0
    %274 = vmatprep.subr.mxu0 %v82
    %275 = vmatpush1.msra.mxu0 %v81
    %276 = vmatprep.subr.mxu0 %v78
    %277 = vmatpush1.msra.mxu0 %v77
    %278 = vmatprep.subr.mxu0 %v74
    %279 = vmatpush1.msra.mxu0 %v73
    %280 = vmatprep.subr.mxu0 %v70
    %281 = vmatpush1.msra.mxu0 %v69
    %282 = vmatprep.subr.mxu0 0.0
    %283 = vmatpush2.msra.mxu0 0.0
    %284 = vmatprep.subr.mxu0 0.0
    %285 = vmatpush2.msra.mxu0 0.0
    %286 = vmatprep.subr.mxu0 0.0
    %287 = vmatpush2.msra.mxu0 0.0
    %288 = vmatprep.subr.mxu0 0.0
    %289 = vmatpush2.msra.mxu0 0.0
    %290 = vmatprep.subr.mxu0 0.0
    %291 = vmatpush2.msra.mxu0 0.0
    %292 = vmatprep.subr.mxu0 0.0
    %293 = vmatpush2.msra.mxu0 0.0
    %294 = vmatprep.subr.mxu0 0.0
    %295 = vmatpush2.msra.mxu0 0.0
    %296 = vmatprep.subr.mxu0 0.0
    %297 = vmatpush2.msra.mxu0 0.0
    %298 = vmatprep.subr.mxu0 0.0
    %299 = vmatpush2.msra.mxu0 0.0
    %300 = vmatprep.subr.mxu0 0.0
    %301 = vmatpush2.msra.mxu0 0.0
    %302 = vmatprep.subr.mxu0 0.0
    %303 = vmatpush2.msra.mxu0 0.0
    %304 = vmatprep.subr.mxu0 0.0
    %305 = vmatpush2.msra.mxu0 0.0
    %306 = vmatprep.subr.mxu0 0.0
    %307 = vmatpush2.msra.mxu0 0.0
    %308 = vmatprep.subr.mxu0 0.0
    %309 = vmatpush2.msra.mxu0 0.0
    %310 = vmatprep.subr.mxu0 0.0
    %311 = vmatpush2.msra.mxu0 0.0
    %312 = vmatprep.subr.mxu0 0.0
    %313 = vmatpush2.msra.mxu0 0.0
    %314 = vmatprep.mubr.f32.mxu0 0.0
    %315 = vmatmul.mubr.f32.gmra.mxu0 %v248
    %v316 = vpop.f32.mrf.mxu0
    %v317 = vadd.f32 %v172, %v316
    %v318 = vpop.f32.mrf.mxu0
    %v319 = vadd.f32 %v174, %v318
    %320 = vdwg.mxu0
    %321 = vmatprep.subr.mxu0 0.0
    %322 = vmatpush1.msra.mxu0 0.0
    %323 = vmatprep.subr.mxu0 0.0
    %324 = vmatpush1.msra.mxu0 0.0
    %325 = vmatprep.subr.mxu0 0.0
    %326 = vmatpush1.msra.mxu0 0.0
    %327 = vmatprep.subr.mxu0 0.0
    %328 = vmatpush1.msra.mxu0 0.0
    %329 = vmatprep.subr.mxu0 0.0
    %330 = vmatpush1.msra.mxu0 0.0
    %331 = vmatprep.subr.mxu0 0.0
    %332 = vmatpush1.msra.mxu0 0.0
    %333 = vmatprep.subr.mxu0 0.0
    %334 = vmatpush1.msra.mxu0 0.0
    %335 = vmatprep.subr.mxu0 0.0
    %336 = vmatpush1.msra.mxu0 0.0
    %337 = vmatprep.subr.mxu0 0.0
    %338 = vmatpush1.msra.mxu0 0.0
    %339 = vmatprep.subr.mxu0 0.0
    %340 = vmatpush1.msra.mxu0 0.0
    %341 = vmatprep.subr.mxu0 0.0
    %342 = vmatpush1.msra.mxu0 0.0
    %343 = vmatprep.subr.mxu0 0.0
    %344 = vmatpush1.msra.mxu0 0.0
    %345 = vmatprep.subr.mxu0 %v84
    %346 = vmatpush1.msra.mxu0 %v83
    %347 = vmatprep.subr.mxu0 %v80
    %348 = vmatpush1.msra.mxu0 %v79
    %349 = vmatprep.subr.mxu0 %v76
    %350 = vmatpush1.msra.mxu0 %v75
    %351 = vmatprep.subr.mxu0 %v72
    %352 = vmatpush1.msra.mxu0 %v71
    %353 = vmatprep.subr.mxu0 0.0
    %354 = vmatpush2.msra.mxu0 0.0
    %355 = vmatprep.subr.mxu0 0.0
    %356 = vmatpush2.msra.mxu0 0.0
    %357 = vmatprep.subr.mxu0 0.0
    %358 = vmatpush2.msra.mxu0 0.0
    %359 = vmatprep.subr.mxu0 0.0
    %360 = vmatpush2.msra.mxu0 0.0
    %361 = vmatprep.subr.mxu0 0.0
    %362 = vmatpush2.msra.mxu0 0.0
    %363 = vmatprep.subr.mxu0 0.0
    %364 = vmatpush2.msra.mxu0 0.0
    %365 = vmatprep.subr.mxu0 0.0
    %366 = vmatpush2.msra.mxu0 0.0
    %367 = vmatprep.subr.mxu0 0.0
    %368 = vmatpush2.msra.mxu0 0.0
    %369 = vmatprep.subr.mxu0 0.0
    %370 = vmatpush2.msra.mxu0 0.0
    %371 = vmatprep.subr.mxu0 0.0
    %372 = vmatpush2.msra.mxu0 0.0
    %373 = vmatprep.subr.mxu0 0.0
    %374 = vmatpush2.msra.mxu0 0.0
    %375 = vmatprep.subr.mxu0 0.0
    %376 = vmatpush2.msra.mxu0 0.0
    %377 = vmatprep.subr.mxu0 0.0
    %378 = vmatpush2.msra.mxu0 0.0
    %379 = vmatprep.subr.mxu0 0.0
    %380 = vmatpush2.msra.mxu0 0.0
    %381 = vmatprep.subr.mxu0 0.0
    %382 = vmatpush2.msra.mxu0 0.0
    %383 = vmatprep.subr.mxu0 0.0
    %384 = vmatpush2.msra.mxu0 0.0
    %385 = vmatprep.mubr.f32.mxu0 0.0
    %386 = vmatmul.mubr.f32.gmra.mxu0 %v248
    %v387 = vpop.f32.mrf.mxu0
    %v388 = vadd.f32 %v243, %v387
    %v389 = vpop.f32.mrf.mxu0
    %v390 = vadd.f32 %v245, %v389
    %391 = vdwg.mxu0
    %v392 = vld [vmem:[%s5] sm:$0xf]
    %v394 = vlaneseq
    %v395 = vshrl.u32 %v394, 7
    %v396 = vsub.s32 0, %v395
    %v397 = vrot.slane %v392, %v396
    %v398 = vlaneseq
    %v399 = vshrl.u32 %v398, 7
    %v400 = vsub.s32 1, %v399
    %v401 = vrot.slane %v392, %v400
    %v402 = vlaneseq
    %v403 = vshrl.u32 %v402, 7
    %v404 = vsub.s32 2, %v403
    %v405 = vrot.slane %v392, %v404
    %v406 = vlaneseq
    %v407 = vshrl.u32 %v406, 7
    %v408 = vsub.s32 3, %v407
    %v409 = vrot.slane %v392, %v408
    %v414 = vadd.f32 %v317, %v397
    %v415 = vadd.f32 %v319, %v401
    %v416 = vadd.f32 %v388, %v405
    %v417 = vadd.f32 %v390, %v409
    %v418 = vxor.u32 %v414, 2147483648
    %v419 = vmul.f32 %v418, 1.442695
    %v420 = vpow.pop %v419
    %v421 = vadd.f32 %v420, 1.0
    %v422 = vrcp.pop %v421
    %v423 = vmul.f32 1.0, %v422
    %v424 = vxor.u32 %v415, 2147483648
    %v425 = vmul.f32 %v424, 1.442695
    %v426 = vpow.pop %v425
    %v427 = vadd.f32 %v426, 1.0
    %v428 = vrcp.pop %v427
    %v429 = vmul.f32 1.0, %v428
    %v430 = vmul.f32 %v423, %v417
    %v431 = vadd.f32 %v416, %v430
    %v432 = vtanh.pop %v431
    %v433 = vsub.f32 1.0, %v429
    %v434 = vmul.f32 %v433, %v432
    %v435 = vmul.f32 %v429, %v68
    %v436 = vadd.f32 %v434, %v435
    %vm437 = vcmask 253952
    %438 = vst.msk [vmem:[%s6] sm:$0x1] %vm437, %v436
    // Predicated region
    $region38: #{encoder_forward.1} parent=1 // pred_check
      _
    $region39: #{encoder_forward.1} parent=1 // pred_check_branch
      %440 = sbr.rel (0) target = $region41
    $region40: #{encoder_forward.1} parent=1 // pred_region
      _
    $region41: #{encoder_forward.1} parent=1 // pred_fallthru
      _
    // Predicated region
    $region42: #{encoder_forward.1} parent=1 // pred_check
      _
    $region43: #{encoder_forward.1} parent=1 // pred_check_branch
      %442 = sbr.rel (0) target = $region45
    $region44: #{encoder_forward.1} parent=1 // pred_region
      _
    $region45: #{encoder_forward.1} parent=1 // pred_fallthru
      _
    %443 = vsyncpa [#allocation4], 1
    %444 = vsyncpa [#allocation6], 1

</llo_original>
